<compile_context>
chip_gen: v7x
topology: tpu7x:2x2x1
jax: 0.10.0
libtpu: 0.0.40
codegen_flags: <defaults>
</compile_context>

<pallas_src>
import math

import jax
import jax.numpy as jnp
import numpy as np
from jax.experimental import pallas as pl
from jax.experimental.pallas import tpu as pltpu

EPS = 1e-5        # EquivariantLayerNorm eps
N = 8             # batch
S = 16            # scalar multiplicity (16x0e)
V = 8             # vector multiplicity (8x1o)
DIM = S + 3 * V   # 40
N_LAYERS = 2      # two (Linear -> LayerNorm -> Gate) blocks; + 1 last linear


# ----------------------------------------------------------------------------
# Fused Pallas kernel
# ----------------------------------------------------------------------------
def _layer_body(y_in, w, g, b, ggf, mask_s, mask_v):
    """One MLP block: LinearRS -> EquivariantLayerNorm('layer','component') -> SelfGate.

    y_in : (tile_n, DIM) activation
    w    : (DIM, DIM) block-diagonal equivariant weight
    g, b : (1, DIM) packed affine (g = [g0 | g1 expanded over m], b = [b0 | 0])
    ggf  : (DIM, DIM) zero-padded gate structure matrix
    mask_s, mask_v : (1, DIM) lane masks for scalar / vector channels
    """
    # LinearRS (rescale folded on host): single full-width MXU pass.
    y = jnp.dot(y_in, w, preferred_element_type=jnp.float32)

    # Equivariant LayerNorm, normalization='component', affine=True.
    #   l=0: subtract mean over multiplicities, normalize by RMS, affine w/ bias.
    #   l=1: no centering; component norm averaged over (mul, 2l+1); per-mul weight.
    mu_s = jnp.sum(y * mask_s, axis=-1, keepdims=True) * (1.0 / S)
    yc = y - mu_s * mask_s
    sq = yc * yc
    var_s = jnp.sum(sq * mask_s, axis=-1, keepdims=True) * (1.0 / S)
    var_v = jnp.sum(sq * mask_v, axis=-1, keepdims=True) * (1.0 / (3 * V))
    inv = jax.lax.rsqrt(var_s + EPS) * mask_s + jax.lax.rsqrt(var_v + EPS) * mask_v
    yn = yc * inv * g + b

    # SelfGateModule:
    #   scalar lanes: gate_arg = yn           -> yn * sigmoid(yn)   (SiLU)
    #   vector lanes: gate_arg = |u|^2/sqrt3  -> sigmoid(.) * u     (e3nn 'uuu' TP dot)
    gate_arg = yn * mask_s + jnp.dot(yn * yn, ggf, preferred_element_type=jnp.float32)
    return yn * jax.nn.sigmoid(gate_arg)


def fused_kernel(x_ref, w_ref, a_ref, gg_ref, o_ref):
    ggf = gg_ref[...]                       # (DIM, DIM)
    a = a_ref[...]                          # (2*N_LAYERS, DIM), register-resident

    lane = jax.lax.broadcasted_iota(jnp.int32, (1, DIM), 1)
    mask_s = (lane < S).astype(jnp.float32)  # (1, DIM)
    mask_v = 1.0 - mask_s

    y = x_ref[...]
    for l in range(N_LAYERS):               # unrolled at trace time
        w = w_ref[l]                         # (DIM, DIM), static index
        g = a[2 * l][None, :]
        b = a[2 * l + 1][None, :]
        y = _layer_body(y, w, g, b, ggf, mask_s, mask_v)

    # add_last_linear='no_bias': LinearRS(rescale=False, bias=False), block-diagonal
    # equivariant weight -> one full-width dot; result is already lane-aligned.
    o_ref[...] = jnp.dot(y, w_ref[N_LAYERS],
                         preferred_element_type=jnp.float32).astype(o_ref.dtype)


def mlp_forward_pallas(x, w_stack, aff_pack, gg_full):
    """Single fused pallas_call; row grid so large batches tile (and megacore-shard)."""
    n = x.shape[0]
    tile_n = n if n <= 256 else 256          # 256 is a multiple of 8; full-N at small sizes
    grid = (pl.cdiv(n, tile_n),)

    return pl.pallas_call(
        fused_kernel,
        out_shape=jax.ShapeDtypeStruct((n, DIM), jnp.float32),
        grid_spec=pltpu.PrefetchScalarGridSpec(
            num_scalar_prefetch=0,
            grid=grid,
            in_specs=[
                pl.BlockSpec((tile_n, DIM), lambda i: (i, 0)),
                pl.BlockSpec((N_LAYERS + 1, DIM, DIM), lambda i: (0, 0, 0)),
                pl.BlockSpec((2 * N_LAYERS, DIM), lambda i: (0, 0)),
                pl.BlockSpec((DIM, DIM), lambda i: (0, 0)),
            ],
            out_specs=pl.BlockSpec((tile_n, DIM), lambda i: (i, 0)),
        ),
        compiler_params=pltpu.CompilerParams(dimension_semantics=("parallel",)),
    )(x, w_stack, aff_pack, gg_full)


# ----------------------------------------------------------------------------
# Host-side parameter setup (deterministic synthetic init)
# ----------------------------------------------------------------------------
def make_layer_params(key, s_in, v_in, s_out, v_out, rescale):
    k0, k1, k2, k3, k4 = jax.random.split(key, 5)
    w_scalar = jax.random.normal(k0, (s_in, s_out), jnp.float32)
    w_vector = jax.random.normal(k1, (v_in, v_out), jnp.float32)
    if rescale:  # LinearRS rescale=True -> 1/sqrt(fan_in) per path
        w_scalar = w_scalar / math.sqrt(s_in)
        w_vector = w_vector / math.sqrt(v_in)
    # Full block-diagonal equivariant weight: scalar block + kron(W_vec, I3).
    w_full = np.zeros((s_in + 3 * v_in, s_out + 3 * v_out), np.float32)
    w_full[:s_in, :s_out] = np.asarray(w_scalar)
    w_full[s_in:, s_out:] = np.kron(np.asarray(w_vector), np.eye(3, dtype=np.float32))
    # LayerNorm affine params (weight per mul, bias only for scalars).
    g0 = 1.0 + 0.1 * jax.random.normal(k2, (1, s_out), jnp.float32)
    b0 = 0.1 * jax.random.normal(k3, (1, s_out), jnp.float32)
    g1 = 1.0 + 0.1 * jax.random.normal(k4, (v_out,), jnp.float32)
    g1_e = jnp.repeat(g1, 3)[None, :]                               # (1, 3V)
    g_row = jnp.concatenate([g0, g1_e], axis=-1)                    # (1, DIM)
    b_row = jnp.concatenate([b0, jnp.zeros((1, 3 * v_out), jnp.float32)], axis=-1)
    return dict(w=jnp.asarray(w_full), g_row=g_row, b_row=b_row, g0=g0, b0=b0, g1=g1)


def make_gate_matrix_full(s_out, v_out):
    # Zero-padded folded SelfGate structure: scalar rows/cols are zero, the vector
    # block is kron(I_V, ones(3,3)) / sqrt(3)  (per-mul |u|^2 / sqrt(3), pre-broadcast
    # back over the 3 components so sigmoid applies element-wise).
    # TODO(synk): e3nn 'uuu' TensorProduct path-normalization constant taken as
    # 1/sqrt(2l+1); any deviation is a global scale on the gate argument only.
    gg = np.zeros((s_out + 3 * v_out, s_out + 3 * v_out), np.float32)
    gg[s_out:, s_out:] = np.kron(np.eye(v_out, dtype=np.float32),
                                 np.ones((3, 3), np.float32)) / math.sqrt(3.0)
    return jnp.asarray(gg)


def pack_params(layer_params, last_w):
    w_stack = jnp.stack([p["w"] for p in layer_params] + [last_w], axis=0)   # (L+1, DIM, DIM)
    aff_rows = []
    for p in layer_params:
        aff_rows += [p["g_row"], p["b_row"]]
    aff_pack = jnp.concatenate(aff_rows, axis=0)                              # (2L, DIM)
    return w_stack, aff_pack


# ----------------------------------------------------------------------------
# Pure-JAX reference (independent of the kernel formulation)
# ----------------------------------------------------------------------------
def reference_layer(x, p, s_dim, v_dim):
    y = x @ p["w"]
    s = y[:, :s_dim]
    v = y[:, s_dim:].reshape(-1, v_dim, 3)
    mu = s.mean(-1, keepdims=True)
    sc = s - mu
    s_n = sc * jax.lax.rsqrt((sc ** 2).mean(-1, keepdims=True) + EPS) * p["g0"] + p["b0"]
    vn = (v ** 2).mean(-1).mean(-1)[:, None, None]
    v_n = v * jax.lax.rsqrt(vn + EPS) * p["g1"][None, :, None]
    s_out = jax.nn.silu(s_n)
    dots = (v_n ** 2).sum(-1) / math.sqrt(3.0)
    v_out = v_n * jax.nn.sigmoid(dots)[:, :, None]
    return jnp.concatenate([s_out, v_out.reshape(-1, 3 * v_dim)], axis=-1)


def mlp_forward_ref(x, layer_params, last_w):
    h = x
    for p in layer_params:
        h = reference_layer(h, p, S, V)
    return h @ last_w


# ----------------------------------------------------------------------------
# Main
# ----------------------------------------------------------------------------
if __name__ == "__main__":
    key = jax.random.PRNGKey(0)
    kx, k1, k2, k3 = jax.random.split(key, 4)

    x = jax.random.normal(kx, (N, DIM), jnp.float32)

    layer_params = [
        make_layer_params(k1, S, V, S, V, rescale=True),
        make_layer_params(k2, S, V, S, V, rescale=True),
    ]
    last_w = make_layer_params(k3, S, V, S, V, rescale=False)["w"]

    w_stack, aff_pack = pack_params(layer_params, last_w)
    gg_full = make_gate_matrix_full(S, V)

    out = jax.block_until_ready(mlp_forward_pallas(x, w_stack, aff_pack, gg_full))

    ref = mlp_forward_ref(x, layer_params, last_w)
    np.testing.assert_allclose(np.asarray(out), np.asarray(ref), rtol=1e-4, atol=1e-4)

    print("KERNEL_OK")
</pallas_src>

<mosaic_0001>
module attributes {stable_mosaic.version = 11 : i64} {
  func.func @fused_kernel(%arg0: i32, %arg1: memref<8x40xf32, #tpu.memory_space<vmem>>, %arg2: memref<3x40x40xf32, #tpu.memory_space<vmem>>, %arg3: memref<4x40xf32, #tpu.memory_space<vmem>>, %arg4: memref<40x40xf32, #tpu.memory_space<vmem>>, %arg5: memref<8x40xf32, #tpu.memory_space<vmem>>) attributes {dimension_semantics = [#tpu.dimension_semantics<parallel>], iteration_bounds = array<i64: 1>, scalar_prefetch = 0 : i64, scratch_operands = 0 : i64, tpu.core_type = #tpu.core_type<tc>, window_params = [{transform_indices = @transform_0, window_bounds = array<i64: 8, 40>}, {pipeline_mode = #tpu.pipeline_mode<synchronous>, transform_indices = @transform_1, window_bounds = array<i64: 3, 40, 40>}, {pipeline_mode = #tpu.pipeline_mode<synchronous>, transform_indices = @transform_2, window_bounds = array<i64: 4, 40>}, {pipeline_mode = #tpu.pipeline_mode<synchronous>, transform_indices = @transform_3, window_bounds = array<i64: 40, 40>}, {transform_indices = @transform_4, window_bounds = array<i64: 8, 40>}]} {
    %c0 = arith.constant 0 : index
    %c0_0 = arith.constant 0 : index
    %0 = vector.load %arg4[%c0, %c0_0] : memref<40x40xf32, #tpu.memory_space<vmem>>, vector<40x40xf32>
    %c0_1 = arith.constant 0 : index
    %c0_2 = arith.constant 0 : index
    %1 = vector.load %arg3[%c0_1, %c0_2] : memref<4x40xf32, #tpu.memory_space<vmem>>, vector<4x40xf32>
    %2 = tpu.iota {dimensions = array<i32: 1>} : vector<1x40xi32>
    %c16_i32 = arith.constant 16 : i32
    %3 = vector.broadcast %c16_i32 : i32 to vector<1x40xi32>
    %4 = arith.cmpi slt, %2, %3 : vector<1x40xi32>
    %5 = arith.extui %4 : vector<1x40xi1> to vector<1x40xi32>
    %6 = arith.sitofp %5 : vector<1x40xi32> to vector<1x40xf32>
    %cst = arith.constant 1.000000e+00 : f32
    %7 = vector.broadcast %cst : f32 to vector<1x40xf32>
    %8 = arith.subf %7, %6 : vector<1x40xf32>
    %c0_3 = arith.constant 0 : index
    %c0_4 = arith.constant 0 : index
    %9 = vector.load %arg1[%c0_3, %c0_4] : memref<8x40xf32, #tpu.memory_space<vmem>>, vector<8x40xf32>
    %c0_5 = arith.constant 0 : index
    %c0_6 = arith.constant 0 : index
    %c0_7 = arith.constant 0 : index
    %10 = vector.load %arg2[%c0_5, %c0_6, %c0_7] : memref<3x40x40xf32, #tpu.memory_space<vmem>>, vector<1x40x40xf32>
    %11 = vector.shape_cast %10 : vector<1x40x40xf32> to vector<40x40xf32>
    %12 = vector.extract_strided_slice %1 {offsets = [0, 0], sizes = [1, 40], strides = [1, 1]} : vector<4x40xf32> to vector<1x40xf32>
    %13 = vector.shape_cast %12 : vector<1x40xf32> to vector<40xf32>
    %14 = vector.shape_cast %13 : vector<40xf32> to vector<1x40xf32>
    %15 = vector.extract_strided_slice %1 {offsets = [1, 0], sizes = [1, 40], strides = [1, 1]} : vector<4x40xf32> to vector<1x40xf32>
    %16 = vector.shape_cast %15 : vector<1x40xf32> to vector<40xf32>
    %17 = vector.shape_cast %16 : vector<40xf32> to vector<1x40xf32>
    %cst_8 = arith.constant dense<0.000000e+00> : vector<8x40xf32>
    %18 = tpu.matmul %9, %11, %cst_8 {dimension_numbers = #tpu.dot_dimension_numbers<[1], [0], [0], [1], [0, 0, 1, 1], [], []>} : vector<8x40xf32>, vector<40x40xf32>, vector<8x40xf32> -> vector<8x40xf32>
    %19 = vector.broadcast %6 : vector<1x40xf32> to vector<8x40xf32>
    %20 = arith.mulf %18, %19 : vector<8x40xf32>
    %cst_9 = arith.constant dense<0.000000e+00> : vector<8xf32>
    %21 = vector.multi_reduction <add>, %20, %cst_9 [1] : vector<8x40xf32> to vector<8xf32>
    %22 = vector.shape_cast %21 : vector<8xf32> to vector<8x1xf32>
    %cst_10 = arith.constant 6.250000e-02 : f32
    %23 = vector.broadcast %cst_10 : f32 to vector<8x1xf32>
    %24 = arith.mulf %22, %23 : vector<8x1xf32>
    %25 = vector.broadcast %24 : vector<8x1xf32> to vector<8x40xf32>
    %26 = vector.broadcast %6 : vector<1x40xf32> to vector<8x40xf32>
    %27 = arith.mulf %25, %26 : vector<8x40xf32>
    %28 = arith.subf %18, %27 : vector<8x40xf32>
    %29 = arith.mulf %28, %28 : vector<8x40xf32>
    %30 = vector.broadcast %6 : vector<1x40xf32> to vector<8x40xf32>
    %31 = arith.mulf %29, %30 : vector<8x40xf32>
    %cst_11 = arith.constant dense<0.000000e+00> : vector<8xf32>
    %32 = vector.multi_reduction <add>, %31, %cst_11 [1] : vector<8x40xf32> to vector<8xf32>
    %33 = vector.shape_cast %32 : vector<8xf32> to vector<8x1xf32>
    %cst_12 = arith.constant 6.250000e-02 : f32
    %34 = vector.broadcast %cst_12 : f32 to vector<8x1xf32>
    %35 = arith.mulf %33, %34 : vector<8x1xf32>
    %36 = vector.broadcast %8 : vector<1x40xf32> to vector<8x40xf32>
    %37 = arith.mulf %29, %36 : vector<8x40xf32>
    %cst_13 = arith.constant dense<0.000000e+00> : vector<8xf32>
    %38 = vector.multi_reduction <add>, %37, %cst_13 [1] : vector<8x40xf32> to vector<8xf32>
    %39 = vector.shape_cast %38 : vector<8xf32> to vector<8x1xf32>
    %cst_14 = arith.constant 0.0416666679 : f32
    %40 = vector.broadcast %cst_14 : f32 to vector<8x1xf32>
    %41 = arith.mulf %39, %40 : vector<8x1xf32>
    %cst_15 = arith.constant 9.99999974E-6 : f32
    %42 = vector.broadcast %cst_15 : f32 to vector<8x1xf32>
    %43 = arith.addf %35, %42 : vector<8x1xf32>
    %44 = math.rsqrt %43 : vector<8x1xf32>
    %45 = vector.broadcast %44 : vector<8x1xf32> to vector<8x40xf32>
    %46 = vector.broadcast %6 : vector<1x40xf32> to vector<8x40xf32>
    %47 = arith.mulf %45, %46 : vector<8x40xf32>
    %cst_16 = arith.constant 9.99999974E-6 : f32
    %48 = vector.broadcast %cst_16 : f32 to vector<8x1xf32>
    %49 = arith.addf %41, %48 : vector<8x1xf32>
    %50 = math.rsqrt %49 : vector<8x1xf32>
    %51 = vector.broadcast %50 : vector<8x1xf32> to vector<8x40xf32>
    %52 = vector.broadcast %8 : vector<1x40xf32> to vector<8x40xf32>
    %53 = arith.mulf %51, %52 : vector<8x40xf32>
    %54 = arith.addf %47, %53 : vector<8x40xf32>
    %55 = arith.mulf %28, %54 : vector<8x40xf32>
    %56 = vector.broadcast %14 : vector<1x40xf32> to vector<8x40xf32>
    %57 = arith.mulf %55, %56 : vector<8x40xf32>
    %58 = vector.broadcast %17 : vector<1x40xf32> to vector<8x40xf32>
    %59 = arith.addf %57, %58 : vector<8x40xf32>
    %60 = vector.broadcast %6 : vector<1x40xf32> to vector<8x40xf32>
    %61 = arith.mulf %59, %60 : vector<8x40xf32>
    %62 = arith.mulf %59, %59 : vector<8x40xf32>
    %cst_17 = arith.constant dense<0.000000e+00> : vector<8x40xf32>
    %63 = tpu.matmul %62, %0, %cst_17 {dimension_numbers = #tpu.dot_dimension_numbers<[1], [0], [0], [1], [0, 0, 1, 1], [], []>} : vector<8x40xf32>, vector<40x40xf32>, vector<8x40xf32> -> vector<8x40xf32>
    %64 = arith.addf %61, %63 : vector<8x40xf32>
    %65 = arith.negf %64 : vector<8x40xf32>
    %66 = math.exp %65 : vector<8x40xf32>
    %cst_18 = arith.constant 1.000000e+00 : f32
    %67 = vector.broadcast %cst_18 : f32 to vector<8x40xf32>
    %68 = arith.addf %67, %66 : vector<8x40xf32>
    %69 = arith.divf %67, %68 : vector<8x40xf32>
    %70 = arith.mulf %59, %69 : vector<8x40xf32>
    %c1 = arith.constant 1 : index
    %c0_19 = arith.constant 0 : index
    %c0_20 = arith.constant 0 : index
    %71 = vector.load %arg2[%c1, %c0_19, %c0_20] : memref<3x40x40xf32, #tpu.memory_space<vmem>>, vector<1x40x40xf32>
    %72 = vector.shape_cast %71 : vector<1x40x40xf32> to vector<40x40xf32>
    %73 = vector.extract_strided_slice %1 {offsets = [2, 0], sizes = [1, 40], strides = [1, 1]} : vector<4x40xf32> to vector<1x40xf32>
    %74 = vector.shape_cast %73 : vector<1x40xf32> to vector<40xf32>
    %75 = vector.shape_cast %74 : vector<40xf32> to vector<1x40xf32>
    %76 = vector.extract_strided_slice %1 {offsets = [3, 0], sizes = [1, 40], strides = [1, 1]} : vector<4x40xf32> to vector<1x40xf32>
    %77 = vector.shape_cast %76 : vector<1x40xf32> to vector<40xf32>
    %78 = vector.shape_cast %77 : vector<40xf32> to vector<1x40xf32>
    %cst_21 = arith.constant dense<0.000000e+00> : vector<8x40xf32>
    %79 = tpu.matmul %70, %72, %cst_21 {dimension_numbers = #tpu.dot_dimension_numbers<[1], [0], [0], [1], [0, 0, 1, 1], [], []>} : vector<8x40xf32>, vector<40x40xf32>, vector<8x40xf32> -> vector<8x40xf32>
    %80 = vector.broadcast %6 : vector<1x40xf32> to vector<8x40xf32>
    %81 = arith.mulf %79, %80 : vector<8x40xf32>
    %cst_22 = arith.constant dense<0.000000e+00> : vector<8xf32>
    %82 = vector.multi_reduction <add>, %81, %cst_22 [1] : vector<8x40xf32> to vector<8xf32>
    %83 = vector.shape_cast %82 : vector<8xf32> to vector<8x1xf32>
    %cst_23 = arith.constant 6.250000e-02 : f32
    %84 = vector.broadcast %cst_23 : f32 to vector<8x1xf32>
    %85 = arith.mulf %83, %84 : vector<8x1xf32>
    %86 = vector.broadcast %85 : vector<8x1xf32> to vector<8x40xf32>
    %87 = vector.broadcast %6 : vector<1x40xf32> to vector<8x40xf32>
    %88 = arith.mulf %86, %87 : vector<8x40xf32>
    %89 = arith.subf %79, %88 : vector<8x40xf32>
    %90 = arith.mulf %89, %89 : vector<8x40xf32>
    %91 = vector.broadcast %6 : vector<1x40xf32> to vector<8x40xf32>
    %92 = arith.mulf %90, %91 : vector<8x40xf32>
    %cst_24 = arith.constant dense<0.000000e+00> : vector<8xf32>
    %93 = vector.multi_reduction <add>, %92, %cst_24 [1] : vector<8x40xf32> to vector<8xf32>
    %94 = vector.shape_cast %93 : vector<8xf32> to vector<8x1xf32>
    %cst_25 = arith.constant 6.250000e-02 : f32
    %95 = vector.broadcast %cst_25 : f32 to vector<8x1xf32>
    %96 = arith.mulf %94, %95 : vector<8x1xf32>
    %97 = vector.broadcast %8 : vector<1x40xf32> to vector<8x40xf32>
    %98 = arith.mulf %90, %97 : vector<8x40xf32>
    %cst_26 = arith.constant dense<0.000000e+00> : vector<8xf32>
    %99 = vector.multi_reduction <add>, %98, %cst_26 [1] : vector<8x40xf32> to vector<8xf32>
    %100 = vector.shape_cast %99 : vector<8xf32> to vector<8x1xf32>
    %cst_27 = arith.constant 0.0416666679 : f32
    %101 = vector.broadcast %cst_27 : f32 to vector<8x1xf32>
    %102 = arith.mulf %100, %101 : vector<8x1xf32>
    %cst_28 = arith.constant 9.99999974E-6 : f32
    %103 = vector.broadcast %cst_28 : f32 to vector<8x1xf32>
    %104 = arith.addf %96, %103 : vector<8x1xf32>
    %105 = math.rsqrt %104 : vector<8x1xf32>
    %106 = vector.broadcast %105 : vector<8x1xf32> to vector<8x40xf32>
    %107 = vector.broadcast %6 : vector<1x40xf32> to vector<8x40xf32>
    %108 = arith.mulf %106, %107 : vector<8x40xf32>
    %cst_29 = arith.constant 9.99999974E-6 : f32
    %109 = vector.broadcast %cst_29 : f32 to vector<8x1xf32>
    %110 = arith.addf %102, %109 : vector<8x1xf32>
    %111 = math.rsqrt %110 : vector<8x1xf32>
    %112 = vector.broadcast %111 : vector<8x1xf32> to vector<8x40xf32>
    %113 = vector.broadcast %8 : vector<1x40xf32> to vector<8x40xf32>
    %114 = arith.mulf %112, %113 : vector<8x40xf32>
    %115 = arith.addf %108, %114 : vector<8x40xf32>
    %116 = arith.mulf %89, %115 : vector<8x40xf32>
    %117 = vector.broadcast %75 : vector<1x40xf32> to vector<8x40xf32>
    %118 = arith.mulf %116, %117 : vector<8x40xf32>
    %119 = vector.broadcast %78 : vector<1x40xf32> to vector<8x40xf32>
    %120 = arith.addf %118, %119 : vector<8x40xf32>
    %121 = vector.broadcast %6 : vector<1x40xf32> to vector<8x40xf32>
    %122 = arith.mulf %120, %121 : vector<8x40xf32>
    %123 = arith.mulf %120, %120 : vector<8x40xf32>
    %cst_30 = arith.constant dense<0.000000e+00> : vector<8x40xf32>
    %124 = tpu.matmul %123, %0, %cst_30 {dimension_numbers = #tpu.dot_dimension_numbers<[1], [0], [0], [1], [0, 0, 1, 1], [], []>} : vector<8x40xf32>, vector<40x40xf32>, vector<8x40xf32> -> vector<8x40xf32>
    %125 = arith.addf %122, %124 : vector<8x40xf32>
    %126 = arith.negf %125 : vector<8x40xf32>
    %127 = math.exp %126 : vector<8x40xf32>
    %cst_31 = arith.constant 1.000000e+00 : f32
    %128 = vector.broadcast %cst_31 : f32 to vector<8x40xf32>
    %129 = arith.addf %128, %127 : vector<8x40xf32>
    %130 = arith.divf %128, %129 : vector<8x40xf32>
    %131 = arith.mulf %120, %130 : vector<8x40xf32>
    %c2 = arith.constant 2 : index
    %c0_32 = arith.constant 0 : index
    %c0_33 = arith.constant 0 : index
    %132 = vector.load %arg2[%c2, %c0_32, %c0_33] : memref<3x40x40xf32, #tpu.memory_space<vmem>>, vector<1x40x40xf32>
    %133 = vector.shape_cast %132 : vector<1x40x40xf32> to vector<40x40xf32>
    %cst_34 = arith.constant dense<0.000000e+00> : vector<8x40xf32>
    %134 = tpu.matmul %131, %133, %cst_34 {dimension_numbers = #tpu.dot_dimension_numbers<[1], [0], [0], [1], [0, 0, 1, 1], [], []>} : vector<8x40xf32>, vector<40x40xf32>, vector<8x40xf32> -> vector<8x40xf32>
    %c0_35 = arith.constant 0 : index
    %c0_36 = arith.constant 0 : index
    %135 = vector.load %arg5[%c0_35, %c0_36] : memref<8x40xf32, #tpu.memory_space<vmem>>, vector<8x40xf32>
    tpu.vector_store %arg5[%c0_35, %c0_36], %134 {strides = array<i32>} : memref<8x40xf32, #tpu.memory_space<vmem>>, vector<8x40xf32>,
    return
  }
  func.func @transform_0(%arg0: i32) -> (i32, i32) {
    %c0_i32 = arith.constant 0 : i32
    %c0_i32_0 = arith.constant 0 : i32
    return %arg0, %c0_i32 : i32, i32
  }
  func.func @transform_1(%arg0: i32) -> (i32, i32, i32) {
    %c0_i32 = arith.constant 0 : i32
    %c0_i32_0 = arith.constant 0 : i32
    %c0_i32_1 = arith.constant 0 : i32
    %c0_i32_2 = arith.constant 0 : i32
    return %c0_i32, %c0_i32_0, %c0_i32_1 : i32, i32, i32
  }
  func.func @transform_2(%arg0: i32) -> (i32, i32) {
    %c0_i32 = arith.constant 0 : i32
    %c0_i32_0 = arith.constant 0 : i32
    %c0_i32_1 = arith.constant 0 : i32
    return %c0_i32, %c0_i32_0 : i32, i32
  }
  func.func @transform_3(%arg0: i32) -> (i32, i32) {
    %c0_i32 = arith.constant 0 : i32
    %c0_i32_0 = arith.constant 0 : i32
    %c0_i32_1 = arith.constant 0 : i32
    return %c0_i32, %c0_i32_0 : i32, i32
  }
  func.func @transform_4(%arg0: i32) -> (i32, i32) {
    %c0_i32 = arith.constant 0 : i32
    %c0_i32_0 = arith.constant 0 : i32
    return %arg0, %c0_i32 : i32, i32
  }
}

</mosaic_0001>

<llo_original>
// kernel: tpu_custom_call.1
$region0: #{tpu_custom_call.1}
  #allocation0 [shape = 'u32[]', space=smem, size = 0x4, offset = 0x4, fixed_abs, tag = 'smem constant byte address 0x4 - core index']
  #allocation1 [shape = 'u32[144,128]{1,0:T(1,128)}', space=vmem, size = 0x12000, scoped, tag = 'internal scratch']
  %s0 = inlined_call_operand.hbm [shape: f32[8,40], index: 0, kind: input, shape index: {}]
  %s1 = inlined_call_operand.hbm [shape: f32[3,40,40], index: 1, kind: input, shape index: {}]
  %s2 = inlined_call_operand.vmem [shape: f32[4,40], index: 2, kind: input, shape index: {}]
  %s3 = inlined_call_operand.hbm [shape: f32[40,40], index: 3, kind: input, shape index: {}]
  %s4 = inlined_call_operand.hbm [shape: f32[8,40], index: 4, kind: output, shape index: {}]
  %s5 = sld [smem:[#allocation0]]
  $region38: #{tpu_custom_call.1} parent=0
    _
  %s7 = ssub.s32 1, %s5
  %s8 = scalar_select 0, %s7, %s5
  $region1: #{tpu_custom_call.1} parent=0
    #allocation2 [shape = 'u8[4096]{0}', space=vmem, size = 0x1000, scoped, tag = 'input window, operand 0, single buffered']
    #allocation3 [shape = 's32[1]{0}', space=sflag, size = 0x4, scoped, tag = 'scoped memory for tpu_custom_call.1']
    #allocation4 [shape = 's32[1]{0}', space=sflag, size = 0x4, scoped, tag = 'scoped memory for tpu_custom_call.1']
    #allocation5 [shape = 'u8[61440]{0}', space=vmem, size = 0xf000, scoped, tag = 'input window, operand 1, single buffered']
    #allocation6 [shape = 's32[1]{0}', space=sflag, size = 0x4, scoped, tag = 'scoped memory for tpu_custom_call.1']
    #allocation7 [shape = 'u8[20480]{0}', space=vmem, size = 0x5000, scoped, tag = 'input window, operand 3, single buffered']
    #allocation8 [shape = 'u8[4096]{0}', space=vmem, size = 0x1000, scoped, tag = 'output window, operand 0, single buffered']
    %9 = vsyncpa [#allocation3], 0
    %10 = vsyncpa [#allocation6], 0
    %11 = vsyncpa [#allocation4], 0
    // Predicated region
    $region2: #{tpu_custom_call.1} parent=1 // pred_check
      _
    $region3: #{tpu_custom_call.1} parent=1 // pred_check_branch
      %13 = sbr.rel (0) target = $region5
    $region4: #{tpu_custom_call.1} parent=1 // pred_region
      %s15 = ssub.s32 128, 128
      %16 = vsyncadd [#allocation3], %s15
      %s18 = sshll.u32 [#allocation2], 4
      %s19 = int_to_ptr.vmem [resolvable:$true] %s18
      %21 = dma.hbm_to_vmem [thread:$0]  %s0, 128, %s19, [#allocation3]
    $region5: #{tpu_custom_call.1} parent=1 // pred_fallthru
      _
    // Predicated region
    $region6: #{tpu_custom_call.1} parent=1 // pred_check
      _
    $region7: #{tpu_custom_call.1} parent=1 // pred_check_branch
      %23 = sbr.rel (0) target = $region9
    $region8: #{tpu_custom_call.1} parent=1 // pred_region
      %s25 = ssub.s32 1920, 1920
      %26 = vsyncadd [#allocation6], %s25
      %s27 = sshll.u32 [#allocation5], 4
      %s28 = int_to_ptr.vmem [resolvable:$true] %s27
      %33 = dma.hbm_to_vmem [thread:$0]  %s1, 1920, %s28, [#allocation6], 128, 128, 8
    $region9: #{tpu_custom_call.1} parent=1 // pred_fallthru
      _
    // Predicated region
    $region10: #{tpu_custom_call.1} parent=1 // pred_check
      _
    $region11: #{tpu_custom_call.1} parent=1 // pred_check_branch
      %35 = sbr.rel (0) target = $region13
    $region12: #{tpu_custom_call.1} parent=1 // pred_region
      _
    $region13: #{tpu_custom_call.1} parent=1 // pred_fallthru
      _
    // Predicated region
    $region14: #{tpu_custom_call.1} parent=1 // pred_check
      _
    $region15: #{tpu_custom_call.1} parent=1 // pred_check_branch
      %37 = sbr.rel (0) target = $region17
    $region16: #{tpu_custom_call.1} parent=1 // pred_region
      %s39 = ssub.s32 640, 640
      %40 = vsyncadd [#allocation6], %s39
      %s41 = sshll.u32 [#allocation7], 4
      %s42 = int_to_ptr.vmem [resolvable:$true] %s41
      %47 = dma.hbm_to_vmem [thread:$0]  %s3, 640, %s42, [#allocation6], 128, 128, 8
    $region17: #{tpu_custom_call.1} parent=1 // pred_fallthru
      _
    // Predicated region
    $region18: #{tpu_custom_call.1} parent=1 // pred_check
      _
    $region19: #{tpu_custom_call.1} parent=1 // pred_check_branch
      %49 = sbr.rel (0) target = $region21
    $region20: #{tpu_custom_call.1} parent=1 // pred_region
      %50 = dma.done [#allocation3], 128
    $region21: #{tpu_custom_call.1} parent=1 // pred_fallthru
      _
    // Predicated region
    $region22: #{tpu_custom_call.1} parent=1 // pred_check
      _
    $region23: #{tpu_custom_call.1} parent=1 // pred_check_branch
      %52 = sbr.rel (0) target = $region25
    $region24: #{tpu_custom_call.1} parent=1 // pred_region
      %53 = dma.done [#allocation6], 1920
    $region25: #{tpu_custom_call.1} parent=1 // pred_fallthru
      _
    // Predicated region
    $region26: #{tpu_custom_call.1} parent=1 // pred_check
      _
    $region27: #{tpu_custom_call.1} parent=1 // pred_check_branch
      %55 = sbr.rel (0) target = $region29
    $region28: #{tpu_custom_call.1} parent=1 // pred_region
      %56 = dma.done [#allocation6], 640
    $region29: #{tpu_custom_call.1} parent=1 // pred_fallthru
      _
    %v57 = vld [vmem:[#allocation7] sm:$0xff]
    %v58 = vld [vmem:[#allocation7 + $0x8] sm:$0xff]
    %v59 = vld [vmem:[#allocation7 + $0x10] sm:$0xff]
    %v60 = vld [vmem:[#allocation7 + $0x18] sm:$0xff]
    %v61 = vld [vmem:[#allocation7 + $0x20] sm:$0xff]
    %v62 = vld [vmem:[%s2] sm:$0xf]
    %v63 = vlaneseq
    %v64 = vand.u32 %v63, 127
    %vm65 = vcmp.lt.s32.totalorder %v64, 16
    %v66 = vsel %vm65, 1, 0
    %v67 = vcvt.s32.f32 %v66
    %v68 = vsub.f32 1.0, %v67
    %v69 = vld [vmem:[#allocation2] sm:$0xff]
    %v70 = vld [vmem:[#allocation5] sm:$0xff]
    %v71 = vld [vmem:[#allocation5 + $0x8] sm:$0xff]
    %v72 = vld [vmem:[#allocation5 + $0x10] sm:$0xff]
    %v73 = vld [vmem:[#allocation5 + $0x18] sm:$0xff]
    %v74 = vld [vmem:[#allocation5 + $0x20] sm:$0xff]
    %vm75 = vcmask 326656
    %v77 = vsel %vm75, %v69, 0
    %79 = vmatprep.subr.mxu0 0.0
    %80 = vmatpush1.msra.mxu0 %v70
    %81 = vmatprep.subr.mxu0 0.0
    %82 = vmatpush1.msra.mxu0 %v71
    %83 = vmatprep.subr.mxu0 0.0
    %84 = vmatpush1.msra.mxu0 %v72
    %85 = vmatprep.subr.mxu0 0.0
    %86 = vmatpush1.msra.mxu0 %v73
    %87 = vmatprep.subr.mxu0 0.0
    %88 = vmatpush1.msra.mxu0 %v74
    %89 = vmatprep.subr.mxu0 0.0
    %90 = vmatpush1.msra.mxu0 0.0
    %91 = vmatprep.subr.mxu0 0.0
    %92 = vmatpush1.msra.mxu0 0.0
    %93 = vmatprep.subr.mxu0 0.0
    %94 = vmatpush1.msra.mxu0 0.0
    %95 = vmatprep.subr.mxu0 0.0
    %96 = vmatpush1.msra.mxu0 0.0
    %97 = vmatprep.subr.mxu0 0.0
    %98 = vmatpush1.msra.mxu0 0.0
    %99 = vmatprep.subr.mxu0 0.0
    %100 = vmatpush1.msra.mxu0 0.0
    %101 = vmatprep.subr.mxu0 0.0
    %102 = vmatpush1.msra.mxu0 0.0
    %103 = vmatprep.subr.mxu0 0.0
    %104 = vmatpush1.msra.mxu0 0.0
    %105 = vmatprep.subr.mxu0 0.0
    %106 = vmatpush1.msra.mxu0 0.0
    %107 = vmatprep.subr.mxu0 0.0
    %108 = vmatpush1.msra.mxu0 0.0
    %109 = vmatprep.subr.mxu0 0.0
    %110 = vmatpush1.msra.mxu0 0.0
    %111 = vmatprep.subr.mxu0 0.0
    %112 = vmatpush1.msra.mxu0 0.0
    %113 = vmatprep.subr.mxu0 0.0
    %114 = vmatpush1.msra.mxu0 0.0
    %115 = vmatprep.subr.mxu0 0.0
    %116 = vmatpush1.msra.mxu0 0.0
    %117 = vmatprep.subr.mxu0 0.0
    %118 = vmatpush1.msra.mxu0 0.0
    %119 = vmatprep.subr.mxu0 0.0
    %120 = vmatpush1.msra.mxu0 0.0
    %121 = vmatprep.subr.mxu0 0.0
    %122 = vmatpush1.msra.mxu0 0.0
    %123 = vmatprep.subr.mxu0 0.0
    %124 = vmatpush1.msra.mxu0 0.0
    %125 = vmatprep.subr.mxu0 0.0
    %126 = vmatpush1.msra.mxu0 0.0
    %127 = vmatprep.subr.mxu0 0.0
    %128 = vmatpush1.msra.mxu0 0.0
    %129 = vmatprep.subr.mxu0 0.0
    %130 = vmatpush1.msra.mxu0 0.0
    %131 = vmatprep.subr.mxu0 0.0
    %132 = vmatpush1.msra.mxu0 0.0
    %133 = vmatprep.subr.mxu0 0.0
    %134 = vmatpush1.msra.mxu0 0.0
    %135 = vmatprep.subr.mxu0 0.0
    %136 = vmatpush1.msra.mxu0 0.0
    %137 = vmatprep.subr.mxu0 0.0
    %138 = vmatpush1.msra.mxu0 0.0
    %139 = vmatprep.subr.mxu0 0.0
    %140 = vmatpush1.msra.mxu0 0.0
    %141 = vmatprep.subr.mxu0 0.0
    %142 = vmatpush1.msra.mxu0 0.0
    %143 = vmatprep.mubr.f32.mxu0 0.0
    %144 = vmatmul.mubr.f32.gmra.mrb[0].mxu0 %v77
    %v145 = vpop.f32.mrb[0].mxu0
    %v146 = vadd.f32 0.0, %v145
    %v147 = vpop.f32.mrb[0].mxu0
    %148 = vdwg.mxu0
    %v149 = vmul.f32 %v146, %v67
    %v150 = vsel %vm75, %v149, 0.0
    %151 = vadd.xlane.f32.xlu0 %v150
    %v152 = vpop.xlane.xlu0 %151
    %v153 = vmul.f32 %v152, 0.0625
    %v154 = vmul.f32 %v153, %v67
    %v155 = vsub.f32 %v146, %v154
    %v156 = vmul.f32 %v155, %v155
    %v157 = vmul.f32 %v156, %v67
    %v158 = vsel %vm75, %v157, 0.0
    %159 = vadd.xlane.f32.xlu0 %v158
    %v160 = vpop.xlane.xlu0 %159
    %v161 = vmul.f32 %v160, 0.0625
    %v162 = vmul.f32 %v156, %v68
    %v163 = vsel %vm75, %v162, 0.0
    %164 = vadd.xlane.f32.xlu0 %v163
    %v165 = vpop.xlane.xlu0 %164
    %v166 = vmul.f32 %v165, 0.041666668
    %v167 = vadd.f32 %v161, 1e-05
    %v168 = vrsqrt.pop %v167
    %v169 = vmul.f32 %v168, %v67
    %v170 = vadd.f32 %v166, 1e-05
    %v171 = vrsqrt.pop %v170
    %v172 = vmul.f32 %v171, %v68
    %v173 = vadd.f32 %v169, %v172
    %v174 = vmul.f32 %v155, %v173
    %v175 = vlaneseq
    %v176 = vshrl.u32 %v175, 7
    %v177 = vsub.s32 0, %v176
    %v178 = vrot.slane %v62, %v177
    %v179 = vmul.f32 %v174, %v178
    %v180 = vlaneseq
    %v181 = vshrl.u32 %v180, 7
    %v182 = vsub.s32 1, %v181
    %v183 = vrot.slane %v62, %v182
    %v184 = vadd.f32 %v179, %v183
    %v185 = vmul.f32 %v184, %v67
    %v186 = vmul.f32 %v184, %v184
    %v188 = vsel %vm75, %v186, 0
    %190 = vmatprep.subr.mxu0 0.0
    %191 = vmatpush1.msra.mxu0 %v57
    %192 = vmatprep.subr.mxu0 0.0
    %193 = vmatpush1.msra.mxu0 %v58
    %194 = vmatprep.subr.mxu0 0.0
    %195 = vmatpush1.msra.mxu0 %v59
    %196 = vmatprep.subr.mxu0 0.0
    %197 = vmatpush1.msra.mxu0 %v60
    %198 = vmatprep.subr.mxu0 0.0
    %199 = vmatpush1.msra.mxu0 %v61
    %200 = vmatprep.subr.mxu0 0.0
    %201 = vmatpush1.msra.mxu0 0.0
    %202 = vmatprep.subr.mxu0 0.0
    %203 = vmatpush1.msra.mxu0 0.0
    %204 = vmatprep.subr.mxu0 0.0
    %205 = vmatpush1.msra.mxu0 0.0
    %206 = vmatprep.subr.mxu0 0.0
    %207 = vmatpush1.msra.mxu0 0.0
    %208 = vmatprep.subr.mxu0 0.0
    %209 = vmatpush1.msra.mxu0 0.0
    %210 = vmatprep.subr.mxu0 0.0
    %211 = vmatpush1.msra.mxu0 0.0
    %212 = vmatprep.subr.mxu0 0.0
    %213 = vmatpush1.msra.mxu0 0.0
    %214 = vmatprep.subr.mxu0 0.0
    %215 = vmatpush1.msra.mxu0 0.0
    %216 = vmatprep.subr.mxu0 0.0
    %217 = vmatpush1.msra.mxu0 0.0
    %218 = vmatprep.subr.mxu0 0.0
    %219 = vmatpush1.msra.mxu0 0.0
    %220 = vmatprep.subr.mxu0 0.0
    %221 = vmatpush1.msra.mxu0 0.0
    %222 = vmatprep.subr.mxu0 0.0
    %223 = vmatpush1.msra.mxu0 0.0
    %224 = vmatprep.subr.mxu0 0.0
    %225 = vmatpush1.msra.mxu0 0.0
    %226 = vmatprep.subr.mxu0 0.0
    %227 = vmatpush1.msra.mxu0 0.0
    %228 = vmatprep.subr.mxu0 0.0
    %229 = vmatpush1.msra.mxu0 0.0
    %230 = vmatprep.subr.mxu0 0.0
    %231 = vmatpush1.msra.mxu0 0.0
    %232 = vmatprep.subr.mxu0 0.0
    %233 = vmatpush1.msra.mxu0 0.0
    %234 = vmatprep.subr.mxu0 0.0
    %235 = vmatpush1.msra.mxu0 0.0
    %236 = vmatprep.subr.mxu0 0.0
    %237 = vmatpush1.msra.mxu0 0.0
    %238 = vmatprep.subr.mxu0 0.0
    %239 = vmatpush1.msra.mxu0 0.0
    %240 = vmatprep.subr.mxu0 0.0
    %241 = vmatpush1.msra.mxu0 0.0
    %242 = vmatprep.subr.mxu0 0.0
    %243 = vmatpush1.msra.mxu0 0.0
    %244 = vmatprep.subr.mxu0 0.0
    %245 = vmatpush1.msra.mxu0 0.0
    %246 = vmatprep.subr.mxu0 0.0
    %247 = vmatpush1.msra.mxu0 0.0
    %248 = vmatprep.subr.mxu0 0.0
    %249 = vmatpush1.msra.mxu0 0.0
    %250 = vmatprep.subr.mxu0 0.0
    %251 = vmatpush1.msra.mxu0 0.0
    %252 = vmatprep.subr.mxu0 0.0
    %253 = vmatpush1.msra.mxu0 0.0
    %254 = vmatprep.mubr.f32.mxu0 0.0
    %255 = vmatmul.mubr.f32.gmra.mrb[0].mxu0 %v188
    %v256 = vpop.f32.mrb[0].mxu0
    %v257 = vadd.f32 0.0, %v256
    %v258 = vpop.f32.mrb[0].mxu0
    %259 = vdwg.mxu0
    %v260 = vadd.f32 %v185, %v257
    %v261 = vxor.u32 %v260, 2147483648
    %v262 = vmul.f32 %v261, 1.442695
    %v263 = vpow.pop %v262
    %v264 = vadd.f32 %v263, 1.0
    %v265 = vrcp.pop %v264
    %v266 = vmul.f32 1.0, %v265
    %v267 = vmul.f32 %v184, %v266
    %s268 = scalar_lea.vmem [#allocation5], 40
    %v269 = vld [vmem:[%s268] sm:$0xff]
    %v270 = vld [vmem:[%s268 + $0x8] sm:$0xff]
    %v271 = vld [vmem:[%s268 + $0x10] sm:$0xff]
    %v272 = vld [vmem:[%s268 + $0x18] sm:$0xff]
    %v273 = vld [vmem:[%s268 + $0x20] sm:$0xff]
    %v275 = vsel %vm75, %v267, 0
    %277 = vmatprep.subr.mxu0 0.0
    %278 = vmatpush1.msra.mxu0 %v269
    %279 = vmatprep.subr.mxu0 0.0
    %280 = vmatpush1.msra.mxu0 %v270
    %281 = vmatprep.subr.mxu0 0.0
    %282 = vmatpush1.msra.mxu0 %v271
    %283 = vmatprep.subr.mxu0 0.0
    %284 = vmatpush1.msra.mxu0 %v272
    %285 = vmatprep.subr.mxu0 0.0
    %286 = vmatpush1.msra.mxu0 %v273
    %287 = vmatprep.subr.mxu0 0.0
    %288 = vmatpush1.msra.mxu0 0.0
    %289 = vmatprep.subr.mxu0 0.0
    %290 = vmatpush1.msra.mxu0 0.0
    %291 = vmatprep.subr.mxu0 0.0
    %292 = vmatpush1.msra.mxu0 0.0
    %293 = vmatprep.subr.mxu0 0.0
    %294 = vmatpush1.msra.mxu0 0.0
    %295 = vmatprep.subr.mxu0 0.0
    %296 = vmatpush1.msra.mxu0 0.0
    %297 = vmatprep.subr.mxu0 0.0
    %298 = vmatpush1.msra.mxu0 0.0
    %299 = vmatprep.subr.mxu0 0.0
    %300 = vmatpush1.msra.mxu0 0.0
    %301 = vmatprep.subr.mxu0 0.0
    %302 = vmatpush1.msra.mxu0 0.0
    %303 = vmatprep.subr.mxu0 0.0
    %304 = vmatpush1.msra.mxu0 0.0
    %305 = vmatprep.subr.mxu0 0.0
    %306 = vmatpush1.msra.mxu0 0.0
    %307 = vmatprep.subr.mxu0 0.0
    %308 = vmatpush1.msra.mxu0 0.0
    %309 = vmatprep.subr.mxu0 0.0
    %310 = vmatpush1.msra.mxu0 0.0
    %311 = vmatprep.subr.mxu0 0.0
    %312 = vmatpush1.msra.mxu0 0.0
    %313 = vmatprep.subr.mxu0 0.0
    %314 = vmatpush1.msra.mxu0 0.0
    %315 = vmatprep.subr.mxu0 0.0
    %316 = vmatpush1.msra.mxu0 0.0
    %317 = vmatprep.subr.mxu0 0.0
    %318 = vmatpush1.msra.mxu0 0.0
    %319 = vmatprep.subr.mxu0 0.0
    %320 = vmatpush1.msra.mxu0 0.0
    %321 = vmatprep.subr.mxu0 0.0
    %322 = vmatpush1.msra.mxu0 0.0
    %323 = vmatprep.subr.mxu0 0.0
    %324 = vmatpush1.msra.mxu0 0.0
    %325 = vmatprep.subr.mxu0 0.0
    %326 = vmatpush1.msra.mxu0 0.0
    %327 = vmatprep.subr.mxu0 0.0
    %328 = vmatpush1.msra.mxu0 0.0
    %329 = vmatprep.subr.mxu0 0.0
    %330 = vmatpush1.msra.mxu0 0.0
    %331 = vmatprep.subr.mxu0 0.0
    %332 = vmatpush1.msra.mxu0 0.0
    %333 = vmatprep.subr.mxu0 0.0
    %334 = vmatpush1.msra.mxu0 0.0
    %335 = vmatprep.subr.mxu0 0.0
    %336 = vmatpush1.msra.mxu0 0.0
    %337 = vmatprep.subr.mxu0 0.0
    %338 = vmatpush1.msra.mxu0 0.0
    %339 = vmatprep.subr.mxu0 0.0
    %340 = vmatpush1.msra.mxu0 0.0
    %341 = vmatprep.mubr.f32.mxu0 0.0
    %342 = vmatmul.mubr.f32.gmra.mrb[0].mxu0 %v275
    %v343 = vpop.f32.mrb[0].mxu0
    %v344 = vadd.f32 0.0, %v343
    %v345 = vpop.f32.mrb[0].mxu0
    %346 = vdwg.mxu0
    %v347 = vmul.f32 %v344, %v67
    %v348 = vsel %vm75, %v347, 0.0
    %349 = vadd.xlane.f32.xlu0 %v348
    %v350 = vpop.xlane.xlu0 %349
    %v351 = vmul.f32 %v350, 0.0625
    %v352 = vmul.f32 %v351, %v67
    %v353 = vsub.f32 %v344, %v352
    %v354 = vmul.f32 %v353, %v353
    %v355 = vmul.f32 %v354, %v67
    %v356 = vsel %vm75, %v355, 0.0
    %357 = vadd.xlane.f32.xlu0 %v356
    %v358 = vpop.xlane.xlu0 %357
    %v359 = vmul.f32 %v358, 0.0625
    %v360 = vmul.f32 %v354, %v68
    %v361 = vsel %vm75, %v360, 0.0
    %362 = vadd.xlane.f32.xlu0 %v361
    %v363 = vpop.xlane.xlu0 %362
    %v364 = vmul.f32 %v363, 0.041666668
    %v365 = vadd.f32 %v359, 1e-05
    %v366 = vrsqrt.pop %v365
    %v367 = vmul.f32 %v366, %v67
    %v368 = vadd.f32 %v364, 1e-05
    %v369 = vrsqrt.pop %v368
    %v370 = vmul.f32 %v369, %v68
    %v371 = vadd.f32 %v367, %v370
    %v372 = vmul.f32 %v353, %v371
    %v373 = vlaneseq
    %v374 = vshrl.u32 %v373, 7
    %v375 = vsub.s32 2, %v374
    %v376 = vrot.slane %v62, %v375
    %v377 = vmul.f32 %v372, %v376
    %v378 = vlaneseq
    %v379 = vshrl.u32 %v378, 7
    %v380 = vsub.s32 3, %v379
    %v381 = vrot.slane %v62, %v380
    %v382 = vadd.f32 %v377, %v381
    %v383 = vmul.f32 %v382, %v67
    %v384 = vmul.f32 %v382, %v382
    %v386 = vsel %vm75, %v384, 0
    %388 = vmatprep.subr.mxu0 0.0
    %389 = vmatpush1.msra.mxu0 %v57
    %390 = vmatprep.subr.mxu0 0.0
    %391 = vmatpush1.msra.mxu0 %v58
    %392 = vmatprep.subr.mxu0 0.0
    %393 = vmatpush1.msra.mxu0 %v59
    %394 = vmatprep.subr.mxu0 0.0
    %395 = vmatpush1.msra.mxu0 %v60
    %396 = vmatprep.subr.mxu0 0.0
    %397 = vmatpush1.msra.mxu0 %v61
    %398 = vmatprep.subr.mxu0 0.0
    %399 = vmatpush1.msra.mxu0 0.0
    %400 = vmatprep.subr.mxu0 0.0
    %401 = vmatpush1.msra.mxu0 0.0
    %402 = vmatprep.subr.mxu0 0.0
    %403 = vmatpush1.msra.mxu0 0.0
    %404 = vmatprep.subr.mxu0 0.0
    %405 = vmatpush1.msra.mxu0 0.0
    %406 = vmatprep.subr.mxu0 0.0
    %407 = vmatpush1.msra.mxu0 0.0
    %408 = vmatprep.subr.mxu0 0.0
    %409 = vmatpush1.msra.mxu0 0.0
    %410 = vmatprep.subr.mxu0 0.0
    %411 = vmatpush1.msra.mxu0 0.0
    %412 = vmatprep.subr.mxu0 0.0
    %413 = vmatpush1.msra.mxu0 0.0
    %414 = vmatprep.subr.mxu0 0.0
    %415 = vmatpush1.msra.mxu0 0.0
    %416 = vmatprep.subr.mxu0 0.0
    %417 = vmatpush1.msra.mxu0 0.0
    %418 = vmatprep.subr.mxu0 0.0
    %419 = vmatpush1.msra.mxu0 0.0
    %420 = vmatprep.subr.mxu0 0.0
    %421 = vmatpush1.msra.mxu0 0.0
    %422 = vmatprep.subr.mxu0 0.0
    %423 = vmatpush1.msra.mxu0 0.0
    %424 = vmatprep.subr.mxu0 0.0
    %425 = vmatpush1.msra.mxu0 0.0
    %426 = vmatprep.subr.mxu0 0.0
    %427 = vmatpush1.msra.mxu0 0.0
    %428 = vmatprep.subr.mxu0 0.0
    %429 = vmatpush1.msra.mxu0 0.0
    %430 = vmatprep.subr.mxu0 0.0
    %431 = vmatpush1.msra.mxu0 0.0
    %432 = vmatprep.subr.mxu0 0.0
    %433 = vmatpush1.msra.mxu0 0.0
    %434 = vmatprep.subr.mxu0 0.0
    %435 = vmatpush1.msra.mxu0 0.0
    %436 = vmatprep.subr.mxu0 0.0
    %437 = vmatpush1.msra.mxu0 0.0
    %438 = vmatprep.subr.mxu0 0.0
    %439 = vmatpush1.msra.mxu0 0.0
    %440 = vmatprep.subr.mxu0 0.0
    %441 = vmatpush1.msra.mxu0 0.0
    %442 = vmatprep.subr.mxu0 0.0
    %443 = vmatpush1.msra.mxu0 0.0
    %444 = vmatprep.subr.mxu0 0.0
    %445 = vmatpush1.msra.mxu0 0.0
    %446 = vmatprep.subr.mxu0 0.0
    %447 = vmatpush1.msra.mxu0 0.0
    %448 = vmatprep.subr.mxu0 0.0
    %449 = vmatpush1.msra.mxu0 0.0
    %450 = vmatprep.subr.mxu0 0.0
    %451 = vmatpush1.msra.mxu0 0.0
    %452 = vmatprep.mubr.f32.mxu0 0.0
    %453 = vmatmul.mubr.f32.gmra.mrb[0].mxu0 %v386
    %v454 = vpop.f32.mrb[0].mxu0
    %v455 = vadd.f32 0.0, %v454
    %v456 = vpop.f32.mrb[0].mxu0
    %457 = vdwg.mxu0
    %v458 = vadd.f32 %v383, %v455
    %v459 = vxor.u32 %v458, 2147483648
    %v460 = vmul.f32 %v459, 1.442695
    %v461 = vpow.pop %v460
    %v462 = vadd.f32 %v461, 1.0
    %v463 = vrcp.pop %v462
    %v464 = vmul.f32 1.0, %v463
    %v465 = vmul.f32 %v382, %v464
    %s466 = scalar_lea.vmem [#allocation5], 80
    %v467 = vld [vmem:[%s466] sm:$0xff]
    %v468 = vld [vmem:[%s466 + $0x8] sm:$0xff]
    %v469 = vld [vmem:[%s466 + $0x10] sm:$0xff]
    %v470 = vld [vmem:[%s466 + $0x18] sm:$0xff]
    %v471 = vld [vmem:[%s466 + $0x20] sm:$0xff]
    %v473 = vsel %vm75, %v465, 0
    %475 = vmatprep.subr.mxu0 0.0
    %476 = vmatpush1.msra.mxu0 %v467
    %477 = vmatprep.subr.mxu0 0.0
    %478 = vmatpush1.msra.mxu0 %v468
    %479 = vmatprep.subr.mxu0 0.0
    %480 = vmatpush1.msra.mxu0 %v469
    %481 = vmatprep.subr.mxu0 0.0
    %482 = vmatpush1.msra.mxu0 %v470
    %483 = vmatprep.subr.mxu0 0.0
    %484 = vmatpush1.msra.mxu0 %v471
    %485 = vmatprep.subr.mxu0 0.0
    %486 = vmatpush1.msra.mxu0 0.0
    %487 = vmatprep.subr.mxu0 0.0
    %488 = vmatpush1.msra.mxu0 0.0
    %489 = vmatprep.subr.mxu0 0.0
    %490 = vmatpush1.msra.mxu0 0.0
    %491 = vmatprep.subr.mxu0 0.0
    %492 = vmatpush1.msra.mxu0 0.0
    %493 = vmatprep.subr.mxu0 0.0
    %494 = vmatpush1.msra.mxu0 0.0
    %495 = vmatprep.subr.mxu0 0.0
    %496 = vmatpush1.msra.mxu0 0.0
    %497 = vmatprep.subr.mxu0 0.0
    %498 = vmatpush1.msra.mxu0 0.0
    %499 = vmatprep.subr.mxu0 0.0
    %500 = vmatpush1.msra.mxu0 0.0
    %501 = vmatprep.subr.mxu0 0.0
    %502 = vmatpush1.msra.mxu0 0.0
    %503 = vmatprep.subr.mxu0 0.0
    %504 = vmatpush1.msra.mxu0 0.0
    %505 = vmatprep.subr.mxu0 0.0
    %506 = vmatpush1.msra.mxu0 0.0
    %507 = vmatprep.subr.mxu0 0.0
    %508 = vmatpush1.msra.mxu0 0.0
    %509 = vmatprep.subr.mxu0 0.0
    %510 = vmatpush1.msra.mxu0 0.0
    %511 = vmatprep.subr.mxu0 0.0
    %512 = vmatpush1.msra.mxu0 0.0
    %513 = vmatprep.subr.mxu0 0.0
    %514 = vmatpush1.msra.mxu0 0.0
    %515 = vmatprep.subr.mxu0 0.0
    %516 = vmatpush1.msra.mxu0 0.0
    %517 = vmatprep.subr.mxu0 0.0
    %518 = vmatpush1.msra.mxu0 0.0
    %519 = vmatprep.subr.mxu0 0.0
    %520 = vmatpush1.msra.mxu0 0.0
    %521 = vmatprep.subr.mxu0 0.0
    %522 = vmatpush1.msra.mxu0 0.0
    %523 = vmatprep.subr.mxu0 0.0
    %524 = vmatpush1.msra.mxu0 0.0
    %525 = vmatprep.subr.mxu0 0.0
    %526 = vmatpush1.msra.mxu0 0.0
    %527 = vmatprep.subr.mxu0 0.0
    %528 = vmatpush1.msra.mxu0 0.0
    %529 = vmatprep.subr.mxu0 0.0
    %530 = vmatpush1.msra.mxu0 0.0
    %531 = vmatprep.subr.mxu0 0.0
    %532 = vmatpush1.msra.mxu0 0.0
    %533 = vmatprep.subr.mxu0 0.0
    %534 = vmatpush1.msra.mxu0 0.0
    %535 = vmatprep.subr.mxu0 0.0
    %536 = vmatpush1.msra.mxu0 0.0
    %537 = vmatprep.subr.mxu0 0.0
    %538 = vmatpush1.msra.mxu0 0.0
    %539 = vmatprep.mubr.f32.mxu0 0.0
    %540 = vmatmul.mubr.f32.gmra.mrb[0].mxu0 %v473
    %v541 = vpop.f32.mrb[0].mxu0
    %v542 = vadd.f32 0.0, %v541
    %v543 = vpop.f32.mrb[0].mxu0
    %544 = vdwg.mxu0
    %545 = vst.msk [vmem:[#allocation8] sm:$0xff] %vm75, %v542
    // Predicated region
    $region30: #{tpu_custom_call.1} parent=1 // pred_check
      _
    $region31: #{tpu_custom_call.1} parent=1 // pred_check_branch
      %547 = sbr.rel (0) target = $region33
    $region32: #{tpu_custom_call.1} parent=1 // pred_region
      %s549 = ssub.s32 128, 128
      %550 = vsyncadd [#allocation4], %s549
      %s552 = sshll.u32 [#allocation8], 4
      %s553 = int_to_ptr.vmem [resolvable:$true] %s552
      %555 = dma.vmem_to_hbm [thread:$0]  %s553, 128, %s4, [#allocation4]
    $region33: #{tpu_custom_call.1} parent=1 // pred_fallthru
      _
    // Predicated region
    $region34: #{tpu_custom_call.1} parent=1 // pred_check
      _
    $region35: #{tpu_custom_call.1} parent=1 // pred_check_branch
      %557 = sbr.rel (0) target = $region37
    $region36: #{tpu_custom_call.1} parent=1 // pred_region
      %558 = dma.done [#allocation4], 128
    $region37: #{tpu_custom_call.1} parent=1 // pred_fallthru
      _
    %559 = vsyncpa [#allocation3], 1
    %560 = vsyncpa [#allocation6], 1
    %561 = vsyncpa [#allocation4], 1

</llo_original>
